<compile_context>
chip_gen: v6e
topology: v6e:2x2x1
jax: 0.10.0
libtpu: 0.0.40
codegen_flags: <defaults>
</compile_context>

<pallas_src>
from functools import partial

import jax
import jax.numpy as jnp
from jax.experimental import pallas as pl
from jax.experimental.pallas import tpu as pltpu


def _round_up(x: int, m: int) -> int:
    return ((x + m - 1) // m) * m


def _cdiv(a: int, b: int) -> int:
    return (a + b - 1) // b


def _pad2d(a, shape, dtype):
    """Zero-pad/cast a 2-D array; no-op when shape and dtype already match."""
    a = jnp.asarray(a)
    if tuple(a.shape) == tuple(shape) and a.dtype == jnp.dtype(dtype):
        return a
    out = jnp.zeros(shape, dtype)
    return out.at[: a.shape[0], : a.shape[1]].set(a.astype(dtype))


def _default_vmem_limit():
    """~3/4 of physical VMEM (96 MiB on v5e/v6e, 48 MiB on v7x); safe fallback."""
    try:
        cap = int(pltpu.get_tpu_info().vmem_capacity_bytes)
        return max(32 * 1024 * 1024, min(96 * 1024 * 1024, (cap * 3) // 4))
    except Exception:
        return 32 * 1024 * 1024


def _vdec_kernel(x_ref, w1_ref, b1_ref, w2_ref, b2_ref, mask_ref, eps_ref,
                 z_ref, mu_ref, lv_ref, acc_ref, *, out_p):
    # Program ids read once at TOP LEVEL of the kernel (never inside pl.when
    # bodies — that was the cause of the previous lowering failure).
    k = pl.program_id(1)
    k_last = pl.num_programs(1) - 1

    @pl.when(k == 0)
    def _init():
        acc_ref[...] = jnp.zeros_like(acc_ref)

    # ---- Layer 1: bf16 MXU matmul, f32 accumulation streamed over K tiles ----
    acc_ref[...] += jnp.dot(x_ref[...], w1_ref[...],
                            preferred_element_type=jnp.float32)

    @pl.when(k == k_last)
    def _epilogue():
        # bias + ReLU + pre-scaled dropout mask (values are 0 or 1/keep_prob);
        # the mask tile was DMA'd while the K loop ran, so this is one VPU pass.
        h = jnp.maximum(acc_ref[...] + b1_ref[...], 0.0)
        hb = (h * mask_ref[...].astype(jnp.float32)).astype(jnp.bfloat16)

        # ---- Layer 2: ONE fused 2*Op-wide MXU matmul, lane-aligned split ----
        dist = jnp.dot(hb, w2_ref[...],
                       preferred_element_type=jnp.float32) + b2_ref[...]
        mu = dist[:, :out_p]
        lv = dist[:, out_p:]

        # Reparameterization with host-supplied eps ~ N(0, 1).
        z = eps_ref[...] * jnp.exp(0.5 * lv) + mu

        z_ref[...] = z
        mu_ref[...] = mu
        lv_ref[...] = lv


def make_variational_decoder(w1, b1, w2, b2, out_features, *,
                             dropout_p=0.9, block_b=256, block_k=512,
                             vmem_limit_bytes=None):
    """Pads/casts the weights ONCE and returns forward(x, key, training=True).

    w1: [in, hidden]; b1: [hidden] or [1, hidden]; w2: [hidden, 2*out];
    b2: [2*out] or [1, 2*out] (weights already in [in, out] layout).
    """
    w1 = jnp.asarray(w1)
    w2 = jnp.asarray(w2)
    b1 = jnp.asarray(b1).reshape(1, -1)
    b2 = jnp.asarray(b2).reshape(1, -1)
    in_f, hidden = w1.shape
    assert w2.shape == (hidden, 2 * out_features)
    keep_prob = 1.0 - dropout_p

    f32, bf16 = jnp.float32, jnp.bfloat16

    # Lane/sublane-aligned padded dims and K tile.
    tk = min(block_k, _round_up(in_f, 128))      # K tile over in_features
    Kp = _round_up(in_f, tk)
    Hp = _round_up(hidden, 128)
    Op = _round_up(out_features, 128)

    # ---- One-time weight padding / casting (hoisted out of the forward) ----
    w1p = _pad2d(w1, (Kp, Hp), bf16)
    b1p = _pad2d(b1, (1, Hp), f32)
    # Pad each head to Op columns, then fuse -> single (Hp, 2*Op) weight so the
    # kernel does one MXU matmul and a lane-aligned split at column Op.
    w2p = jnp.concatenate([_pad2d(w2[:, :out_features], (Hp, Op), bf16),
                           _pad2d(w2[:, out_features:], (Hp, Op), bf16)], axis=1)
    b2p = jnp.concatenate([_pad2d(b2[:, :out_features], (1, Op), f32),
                           _pad2d(b2[:, out_features:], (1, Op), f32)], axis=1)

    if vmem_limit_bytes is None:
        vmem_limit_bytes = _default_vmem_limit()

    def forward(x, key, training=True, return_noise=False):
        x = jnp.asarray(x)
        B = x.shape[0]
        assert x.shape == (B, in_f)

        # Batch tile: multiple of 16 (bf16 sublane packing) and >= 2 tiles when
        # the batch allows it, so the "parallel" axis shards across both
        # TensorCores on v7x.
        bm = min(block_b, max(16, _round_up(_cdiv(B, 2), 16)))
        Bp = _round_up(B, bm)

        xp = _pad2d(x, (Bp, Kp), bf16)

        # Host-side RNG (jax.random): dropout mask pre-scaled by 1/keep_prob and
        # stored in bf16 (values 0.0 / 10.0 are exact), eps in f32.
        k_drop, k_eps = jax.random.split(key)
        if training:
            keep = jax.random.bernoulli(k_drop, p=keep_prob, shape=(Bp, Hp))
            mask = (keep.astype(f32) * (1.0 / keep_prob)).astype(bf16)
        else:
            mask = jnp.ones((Bp, Hp), bf16)
        eps = jax.random.normal(k_eps, (Bp, Op), f32)

        grid = (Bp // bm, Kp // tk)

        in_specs = [
            pl.BlockSpec((bm, tk), lambda i, k: (i, k)),       # x tile
            pl.BlockSpec((tk, Hp), lambda i, k: (k, 0)),       # w1 (K-streamed)
            pl.BlockSpec((1, Hp), lambda i, k: (0, 0)),        # b1 (resident)
            pl.BlockSpec((Hp, 2 * Op), lambda i, k: (0, 0)),   # fused w2 (resident)
            pl.BlockSpec((1, 2 * Op), lambda i, k: (0, 0)),    # fused b2 (resident)
            pl.BlockSpec((bm, Hp), lambda i, k: (i, 0)),       # scaled dropout mask
            pl.BlockSpec((bm, Op), lambda i, k: (i, 0)),       # eps
        ]
        out_specs = (pl.BlockSpec((bm, Op), lambda i, k: (i, 0)),) * 3
        out_shape = (jax.ShapeDtypeStruct((Bp, Op), f32),) * 3

        flops = 2 * Bp * Kp * Hp + 2 * Bp * Hp * (2 * Op)
        bytes_accessed = (Bp * Kp * 2 + Kp * Hp * 2 + Hp * 2 * Op * 2
                          + (Hp + 2 * Op) * 4
                          + Bp * Hp * 2 + Bp * Op * 4
                          + 3 * Bp * Op * 4)
        cost = pl.CostEstimate(flops=flops, transcendentals=Bp * Op,
                               bytes_accessed=bytes_accessed)

        outs = pl.pallas_call(
            partial(_vdec_kernel, out_p=Op),
            grid=grid,
            in_specs=in_specs,
            out_specs=out_specs,
            out_shape=out_shape,
            scratch_shapes=[pltpu.VMEM((bm, Hp), f32)],        # f32 accumulator
            compiler_params=pltpu.CompilerParams(
                dimension_semantics=("parallel", "arbitrary"),
                vmem_limit_bytes=vmem_limit_bytes),
            cost_estimate=cost,
        )(xp, w1p, b1p, w2p, b2p, mask, eps)

        z = outs[0][:B, :out_features]
        mu = outs[1][:B, :out_features]
        lv = outs[2][:B, :out_features]
        if return_noise:
            return (z, mu, lv), (mask, eps)
        return z, mu, lv

    return forward


def init_params(key, in_features, hidden_size, out_features, dtype=jnp.float32):
    """Deterministic synthetic parameter init (PyTorch Linear-ish uniform)."""
    k1, k2, k3, k4 = jax.random.split(key, 4)
    lim1 = 1.0 / (in_features ** 0.5)
    lim2 = 1.0 / (hidden_size ** 0.5)
    # weights stored already transposed: [in, out]
    w1 = jax.random.uniform(k1, (in_features, hidden_size), dtype, -lim1, lim1)
    b1 = jax.random.uniform(k2, (1, hidden_size), dtype, -lim1, lim1)
    w2 = jax.random.uniform(k3, (hidden_size, 2 * out_features), dtype, -lim2, lim2)
    b2 = jax.random.uniform(k4, (1, 2 * out_features), dtype, -lim2, lim2)
    return w1, b1, w2, b2


if __name__ == "__main__":
    batch = 8
    in_features = 32
    hidden_size = 64
    out_features = 16
    dropout_p = 0.9

    root = jax.random.PRNGKey(0)
    k_param, k_x, k_fwd = jax.random.split(root, 3)
    w1, b1, w2, b2 = init_params(k_param, in_features, hidden_size, out_features)
    x = jax.random.normal(k_x, (batch, in_features), jnp.float32)

    fwd = make_variational_decoder(w1, b1, w2, b2, out_features,
                                   dropout_p=dropout_p)

    # --- Training-mode run; also get the mask/eps actually used for checking ---
    (z, mu, lv), (mask_p, eps_p) = fwd(x, k_fwd, training=True, return_noise=True)
    jax.block_until_ready((z, mu, lv))

    assert z.shape == (batch, out_features)
    assert mu.shape == (batch, out_features)
    assert lv.shape == (batch, out_features)

    # Pure-JAX reference of the same math (same bf16 cast points, same mask/eps).
    mask = mask_p[:batch, :hidden_size].astype(jnp.float32)
    eps = eps_p[:batch, :out_features]
    h_ref = jnp.maximum(
        jnp.dot(x.astype(jnp.bfloat16), w1.astype(jnp.bfloat16),
                preferred_element_type=jnp.float32) + b1.reshape(1, -1), 0.0)
    hb_ref = (h_ref * mask).astype(jnp.bfloat16)
    dist_ref = jnp.dot(hb_ref, w2.astype(jnp.bfloat16),
                       preferred_element_type=jnp.float32) + b2.reshape(1, -1)
    mu_ref = dist_ref[:, :out_features]
    lv_ref = dist_ref[:, out_features:]
    z_ref = eps * jnp.exp(0.5 * lv_ref) + mu_ref

    assert jnp.allclose(mu, mu_ref, atol=5e-3, rtol=5e-3)
    assert jnp.allclose(lv, lv_ref, atol=5e-3, rtol=5e-3)
    assert jnp.allclose(z, z_ref, atol=5e-3, rtol=5e-3)

    # --- Eval-mode sanity run (no dropout) ---
    z2, mu2, lv2 = fwd(x, jax.random.PRNGKey(123), training=False)
    jax.block_until_ready((z2, mu2, lv2))
    assert z2.shape == (batch, out_features)
    assert bool(jnp.all(jnp.isfinite(z2)))
    assert bool(jnp.all(jnp.isfinite(mu2)))
    assert bool(jnp.all(jnp.isfinite(lv2)))

    print("KERNEL_OK")
</pallas_src>

<mosaic_0001>
module attributes {stable_mosaic.version = 11 : i64} {
  func.func @_vdec_kernel(%arg0: i32, %arg1: i32, %arg2: memref<16x128xbf16, #tpu.memory_space<vmem>>, %arg3: memref<128x128xbf16, #tpu.memory_space<vmem>>, %arg4: memref<1x128xf32, #tpu.memory_space<vmem>>, %arg5: memref<128x256xbf16, #tpu.memory_space<vmem>>, %arg6: memref<1x256xf32, #tpu.memory_space<vmem>>, %arg7: memref<16x128xbf16, #tpu.memory_space<vmem>>, %arg8: memref<16x128xf32, #tpu.memory_space<vmem>>, %arg9: memref<16x128xf32, #tpu.memory_space<vmem>>, %arg10: memref<16x128xf32, #tpu.memory_space<vmem>>, %arg11: memref<16x128xf32, #tpu.memory_space<vmem>>, %arg12: memref<16x128xf32, #tpu.memory_space<vmem>>) attributes {dimension_semantics = [#tpu.dimension_semantics<parallel>, #tpu.dimension_semantics<arbitrary>], iteration_bounds = array<i64: 1, 1>, scalar_prefetch = 0 : i64, scratch_operands = 1 : i64, tpu.core_type = #tpu.core_type<tc>, window_params = [{transform_indices = @transform_0, window_bounds = array<i64: 16, 128>}, {transform_indices = @transform_1, window_bounds = array<i64: 128, 128>}, {pipeline_mode = #tpu.pipeline_mode<synchronous>, transform_indices = @transform_2, window_bounds = array<i64: 1, 128>}, {pipeline_mode = #tpu.pipeline_mode<synchronous>, transform_indices = @transform_3, window_bounds = array<i64: 128, 256>}, {pipeline_mode = #tpu.pipeline_mode<synchronous>, transform_indices = @transform_4, window_bounds = array<i64: 1, 256>}, {transform_indices = @transform_5, window_bounds = array<i64: 16, 128>}, {transform_indices = @transform_6, window_bounds = array<i64: 16, 128>}, {transform_indices = @transform_7, window_bounds = array<i64: 16, 128>}, {transform_indices = @transform_8, window_bounds = array<i64: 16, 128>}, {transform_indices = @transform_9, window_bounds = array<i64: 16, 128>}]} {
    %c0_i32 = arith.constant 0 : i32
    %0 = arith.cmpi eq, %arg1, %c0_i32 : i32
    %1 = arith.extui %0 : i1 to i32
    %c0_i32_0 = arith.constant 0 : i32
    %2 = arith.cmpi ne, %1, %c0_i32_0 : i32
    scf.if %2 {
      %cst_10 = arith.constant 0.000000e+00 : f32
      %12 = vector.broadcast %cst_10 : f32 to vector<16x128xf32>
      %c0_11 = arith.constant 0 : index
      %c0_12 = arith.constant 0 : index
      %13 = vector.load %arg12[%c0_11, %c0_12] : memref<16x128xf32, #tpu.memory_space<vmem>>, vector<16x128xf32>
      tpu.vector_store %arg12[%c0_11, %c0_12], %12 {strides = array<i32>} : memref<16x128xf32, #tpu.memory_space<vmem>>, vector<16x128xf32>,
    } else {
    }
    %c0 = arith.constant 0 : index
    %c0_1 = arith.constant 0 : index
    %3 = vector.load %arg12[%c0, %c0_1] : memref<16x128xf32, #tpu.memory_space<vmem>>, vector<16x128xf32>
    %c0_2 = arith.constant 0 : index
    %c0_3 = arith.constant 0 : index
    %4 = vector.load %arg2[%c0_2, %c0_3] : memref<16x128xbf16, #tpu.memory_space<vmem>>, vector<16x128xbf16>
    %c0_4 = arith.constant 0 : index
    %c0_5 = arith.constant 0 : index
    %5 = vector.load %arg3[%c0_4, %c0_5] : memref<128x128xbf16, #tpu.memory_space<vmem>>, vector<128x128xbf16>
    %cst = arith.constant dense<0.000000e+00> : vector<16x128xf32>
    %6 = tpu.matmul %4, %5, %cst {dimension_numbers = #tpu.dot_dimension_numbers<[1], [0], [0], [1], [0, 0, 1, 1], [], []>} : vector<16x128xbf16>, vector<128x128xbf16>, vector<16x128xf32> -> vector<16x128xf32>
    %7 = arith.addf %3, %6 : vector<16x128xf32>
    %c0_6 = arith.constant 0 : index
    %c0_7 = arith.constant 0 : index
    %8 = vector.load %arg12[%c0_6, %c0_7] : memref<16x128xf32, #tpu.memory_space<vmem>>, vector<16x128xf32>
    tpu.vector_store %arg12[%c0_6, %c0_7], %7 {strides = array<i32>} : memref<16x128xf32, #tpu.memory_space<vmem>>, vector<16x128xf32>,
    %c0_i32_8 = arith.constant 0 : i32
    %9 = arith.cmpi eq, %arg1, %c0_i32_8 : i32
    %10 = arith.extui %9 : i1 to i32
    %c0_i32_9 = arith.constant 0 : i32
    %11 = arith.cmpi ne, %10, %c0_i32_9 : i32
    scf.if %11 {
      %c0_10 = arith.constant 0 : index
      %c0_11 = arith.constant 0 : index
      %12 = vector.load %arg12[%c0_10, %c0_11] : memref<16x128xf32, #tpu.memory_space<vmem>>, vector<16x128xf32>
      %c0_12 = arith.constant 0 : index
      %c0_13 = arith.constant 0 : index
      %13 = vector.load %arg4[%c0_12, %c0_13] : memref<1x128xf32, #tpu.memory_space<vmem>>, vector<1x128xf32>
      %14 = vector.broadcast %13 : vector<1x128xf32> to vector<16x128xf32>
      %15 = arith.addf %12, %14 : vector<16x128xf32>
      %cst_14 = arith.constant 0.000000e+00 : f32
      %16 = vector.broadcast %cst_14 : f32 to vector<16x128xf32>
      %17 = arith.maximumf %15, %16 : vector<16x128xf32>
      %c0_15 = arith.constant 0 : index
      %c0_16 = arith.constant 0 : index
      %18 = vector.load %arg7[%c0_15, %c0_16] : memref<16x128xbf16, #tpu.memory_space<vmem>>, vector<16x128xbf16>
      %19 = arith.extf %18 : vector<16x128xbf16> to vector<16x128xf32>
      %20 = arith.mulf %17, %19 : vector<16x128xf32>
      %21 = arith.truncf %20 : vector<16x128xf32> to vector<16x128xbf16>
      %c0_17 = arith.constant 0 : index
      %c0_18 = arith.constant 0 : index
      %22 = vector.load %arg5[%c0_17, %c0_18] : memref<128x256xbf16, #tpu.memory_space<vmem>>, vector<128x256xbf16>
      %cst_19 = arith.constant dense<0.000000e+00> : vector<16x256xf32>
      %23 = tpu.matmul %21, %22, %cst_19 {dimension_numbers = #tpu.dot_dimension_numbers<[1], [0], [0], [1], [0, 0, 1, 1], [], []>} : vector<16x128xbf16>, vector<128x256xbf16>, vector<16x256xf32> -> vector<16x256xf32>
      %c0_20 = arith.constant 0 : index
      %c0_21 = arith.constant 0 : index
      %24 = vector.load %arg6[%c0_20, %c0_21] : memref<1x256xf32, #tpu.memory_space<vmem>>, vector<1x256xf32>
      %25 = vector.broadcast %24 : vector<1x256xf32> to vector<16x256xf32>
      %26 = arith.addf %23, %25 : vector<16x256xf32>
      %27 = vector.extract_strided_slice %26 {offsets = [0, 0], sizes = [16, 128], strides = [1, 1]} : vector<16x256xf32> to vector<16x128xf32>
      %28 = vector.extract_strided_slice %26 {offsets = [0, 128], sizes = [16, 128], strides = [1, 1]} : vector<16x256xf32> to vector<16x128xf32>
      %c0_22 = arith.constant 0 : index
      %c0_23 = arith.constant 0 : index
      %29 = vector.load %arg8[%c0_22, %c0_23] : memref<16x128xf32, #tpu.memory_space<vmem>>, vector<16x128xf32>
      %cst_24 = arith.constant 5.000000e-01 : f32
      %30 = vector.broadcast %cst_24 : f32 to vector<16x128xf32>
      %31 = arith.mulf %30, %28 : vector<16x128xf32>
      %32 = math.exp %31 : vector<16x128xf32>
      %33 = arith.mulf %29, %32 : vector<16x128xf32>
      %34 = arith.addf %33, %27 : vector<16x128xf32>
      %c0_25 = arith.constant 0 : index
      %c0_26 = arith.constant 0 : index
      %35 = vector.load %arg9[%c0_25, %c0_26] : memref<16x128xf32, #tpu.memory_space<vmem>>, vector<16x128xf32>
      tpu.vector_store %arg9[%c0_25, %c0_26], %34 {strides = array<i32>} : memref<16x128xf32, #tpu.memory_space<vmem>>, vector<16x128xf32>,
      %c0_27 = arith.constant 0 : index
      %c0_28 = arith.constant 0 : index
      %36 = vector.load %arg10[%c0_27, %c0_28] : memref<16x128xf32, #tpu.memory_space<vmem>>, vector<16x128xf32>
      tpu.vector_store %arg10[%c0_27, %c0_28], %27 {strides = array<i32>} : memref<16x128xf32, #tpu.memory_space<vmem>>, vector<16x128xf32>,
      %c0_29 = arith.constant 0 : index
      %c0_30 = arith.constant 0 : index
      %37 = vector.load %arg11[%c0_29, %c0_30] : memref<16x128xf32, #tpu.memory_space<vmem>>, vector<16x128xf32>
      tpu.vector_store %arg11[%c0_29, %c0_30], %28 {strides = array<i32>} : memref<16x128xf32, #tpu.memory_space<vmem>>, vector<16x128xf32>,
    } else {
    }
    return
  }
  func.func @transform_0(%arg0: i32, %arg1: i32) -> (i32, i32) {
    %c0_i32 = arith.constant 0 : i32
    return %arg0, %arg1 : i32, i32
  }
  func.func @transform_1(%arg0: i32, %arg1: i32) -> (i32, i32) {
    %c0_i32 = arith.constant 0 : i32
    %c0_i32_0 = arith.constant 0 : i32
    return %arg1, %c0_i32 : i32, i32
  }
  func.func @transform_2(%arg0: i32, %arg1: i32) -> (i32, i32) {
    %c0_i32 = arith.constant 0 : i32
    %c0_i32_0 = arith.constant 0 : i32
    %c0_i32_1 = arith.constant 0 : i32
    return %c0_i32, %c0_i32_0 : i32, i32
  }
  func.func @transform_3(%arg0: i32, %arg1: i32) -> (i32, i32) {
    %c0_i32 = arith.constant 0 : i32
    %c0_i32_0 = arith.constant 0 : i32
    %c0_i32_1 = arith.constant 0 : i32
    return %c0_i32, %c0_i32_0 : i32, i32
  }
  func.func @transform_4(%arg0: i32, %arg1: i32) -> (i32, i32) {
    %c0_i32 = arith.constant 0 : i32
    %c0_i32_0 = arith.constant 0 : i32
    %c0_i32_1 = arith.constant 0 : i32
    return %c0_i32, %c0_i32_0 : i32, i32
  }
  func.func @transform_5(%arg0: i32, %arg1: i32) -> (i32, i32) {
    %c0_i32 = arith.constant 0 : i32
    %c0_i32_0 = arith.constant 0 : i32
    return %arg0, %c0_i32 : i32, i32
  }
  func.func @transform_6(%arg0: i32, %arg1: i32) -> (i32, i32) {
    %c0_i32 = arith.constant 0 : i32
    %c0_i32_0 = arith.constant 0 : i32
    return %arg0, %c0_i32 : i32, i32
  }
  func.func @transform_7(%arg0: i32, %arg1: i32) -> (i32, i32) {
    %c0_i32 = arith.constant 0 : i32
    %c0_i32_0 = arith.constant 0 : i32
    return %arg0, %c0_i32 : i32, i32
  }
  func.func @transform_8(%arg0: i32, %arg1: i32) -> (i32, i32) {
    %c0_i32 = arith.constant 0 : i32
    %c0_i32_0 = arith.constant 0 : i32
    return %arg0, %c0_i32 : i32, i32
  }
  func.func @transform_9(%arg0: i32, %arg1: i32) -> (i32, i32) {
    %c0_i32 = arith.constant 0 : i32
    %c0_i32_0 = arith.constant 0 : i32
    return %arg0, %c0_i32 : i32, i32
  }
}

</mosaic_0001>

<llo_original>
// kernel: tpu_custom_call.1
$region0: #{tpu_custom_call.1}
  #allocation0 [shape = 'u32[]', space=smem, size = 0x4, offset = 0x4, fixed_abs, tag = 'smem constant byte address 0x4 - core index']
  #allocation1 [shape = 'u32[144,128]{1,0:T(1,128)}', space=vmem, size = 0x12000, scoped, tag = 'internal scratch']
  #allocation2 [shape = 'f32[16,128]{1,0:T(8,128)}', space=vmem, size = 0x2000, scoped, tag = 'scratch operand']
  %s0 = inlined_call_operand.hbm [shape: bf16[16,128], index: 0, kind: input, shape index: {}]
  %s1 = inlined_call_operand.hbm [shape: bf16[128,128], index: 1, kind: input, shape index: {}]
  %s2 = inlined_call_operand.vmem [shape: f32[1,128], index: 2, kind: input, shape index: {}]
  %s3 = inlined_call_operand.hbm [shape: bf16[128,256], index: 3, kind: input, shape index: {}]
  %s4 = inlined_call_operand.hbm [shape: f32[1,256], index: 4, kind: input, shape index: {}]
  %s5 = inlined_call_operand.vmem [shape: bf16[16,128], index: 5, kind: input, shape index: {}]
  %s6 = inlined_call_operand.hbm [shape: f32[16,128], index: 6, kind: input, shape index: {}]
  %s7 = inlined_call_operand.hbm [shape: f32[16,128], index: 7, kind: output, shape index: {0}]
  %s8 = inlined_call_operand.hbm [shape: f32[16,128], index: 8, kind: output, shape index: {1}]
  %s9 = inlined_call_operand.hbm [shape: f32[16,128], index: 9, kind: output, shape index: {2}]
  %10 = xla_tuple %s7, %s8, %s9
  %s11 = sld [smem:[#allocation0]]
  $region82: #{tpu_custom_call.1} parent=0
    _
  %s13 = ssub.s32 1, %s11
  %s14 = scalar_select 0, %s13, %s11
  $region1: #{tpu_custom_call.1} parent=0
    #allocation3 [shape = 'u8[4096]{0}', space=vmem, size = 0x1000, scoped, tag = 'input window, operand 0, single buffered']
    #allocation4 [shape = 's32[1]{0}', space=sflag, size = 0x4, scoped, tag = 'scoped memory for tpu_custom_call.1']
    #allocation5 [shape = 's32[1]{0}', space=sflag, size = 0x4, scoped, tag = 'scoped memory for tpu_custom_call.1']
    #allocation6 [shape = 'u8[32768]{0}', space=vmem, size = 0x8000, scoped, tag = 'input window, operand 1, single buffered']
    #allocation7 [shape = 's32[1]{0}', space=sflag, size = 0x4, scoped, tag = 'scoped memory for tpu_custom_call.1']
    #allocation8 [shape = 'u8[65536]{0}', space=vmem, size = 0x10000, scoped, tag = 'input window, operand 3, single buffered']
    #allocation9 [shape = 'u8[1024]{0}', space=vmem, size = 0x400, scoped, tag = 'input window, operand 4, single buffered']
    #allocation10 [shape = 's32[1]{0}', space=sflag, size = 0x4, scoped, tag = 'scoped memory for tpu_custom_call.1']
    #allocation11 [shape = 'u8[8192]{0}', space=vmem, size = 0x2000, scoped, tag = 'input window, operand 6, single buffered']
    #allocation12 [shape = 'u8[8192]{0}', space=vmem, size = 0x2000, scoped, tag = 'output window, operand 0, single buffered']
    #allocation13 [shape = 'u8[8192]{0}', space=vmem, size = 0x2000, scoped, tag = 'output window, operand 1, single buffered']
    #allocation14 [shape = 's32[1]{0}', space=sflag, size = 0x4, scoped, tag = 'scoped memory for tpu_custom_call.1']
    #allocation15 [shape = 'u8[8192]{0}', space=vmem, size = 0x2000, scoped, tag = 'output window, operand 2, single buffered']
    %15 = vsyncpa [#allocation4], 0
    %16 = vsyncpa [#allocation7], 0
    %17 = vsyncpa [#allocation10], 0
    %18 = vsyncpa [#allocation5], 0
    %19 = vsyncpa [#allocation14], 0
    // Predicated region
    $region2: #{tpu_custom_call.1} parent=1 // pred_check
      _
    $region3: #{tpu_custom_call.1} parent=1 // pred_check_branch
      %21 = sbr.rel (0) target = $region5
    $region4: #{tpu_custom_call.1} parent=1 // pred_region
      %s23 = ssub.s32 128, 128
      %24 = vsyncadd [#allocation4], %s23
      %s25 = sshll.u32 [#allocation3], 4
      %s26 = int_to_ptr.vmem [resolvable:$true] %s25
      %31 = dma.hbm_to_vmem [thread:$0]  %s0, 128, %s26, [#allocation4], 64, 64, 4
    $region5: #{tpu_custom_call.1} parent=1 // pred_fallthru
      _
    // Predicated region
    $region6: #{tpu_custom_call.1} parent=1 // pred_check
      _
    $region7: #{tpu_custom_call.1} parent=1 // pred_check_branch
      %33 = sbr.rel (0) target = $region9
    $region8: #{tpu_custom_call.1} parent=1 // pred_region
      %s35 = ssub.s32 1024, 1024
      %36 = vsyncadd [#allocation7], %s35
      %s37 = sshll.u32 [#allocation6], 4
      %s38 = int_to_ptr.vmem [resolvable:$true] %s37
      %43 = dma.hbm_to_vmem [thread:$0]  %s1, 1024, %s38, [#allocation7], 64, 64, 4
    $region9: #{tpu_custom_call.1} parent=1 // pred_fallthru
      _
    // Predicated region
    $region10: #{tpu_custom_call.1} parent=1 // pred_check
      _
    $region11: #{tpu_custom_call.1} parent=1 // pred_check_branch
      %45 = sbr.rel (0) target = $region13
    $region12: #{tpu_custom_call.1} parent=1 // pred_region
      _
    $region13: #{tpu_custom_call.1} parent=1 // pred_fallthru
      _
    // Predicated region
    $region14: #{tpu_custom_call.1} parent=1 // pred_check
      _
    $region15: #{tpu_custom_call.1} parent=1 // pred_check_branch
      %47 = sbr.rel (0) target = $region17
    $region16: #{tpu_custom_call.1} parent=1 // pred_region
      %s49 = ssub.s32 2048, 2048
      %50 = vsyncadd [#allocation7], %s49
      %s51 = sshll.u32 [#allocation8], 4
      %s52 = int_to_ptr.vmem [resolvable:$true] %s51
      %57 = dma.hbm_to_vmem [thread:$0]  %s3, 2048, %s52, [#allocation7], 128, 128, 8
    $region17: #{tpu_custom_call.1} parent=1 // pred_fallthru
      _
    // Predicated region
    $region18: #{tpu_custom_call.1} parent=1 // pred_check
      _
    $region19: #{tpu_custom_call.1} parent=1 // pred_check_branch
      %59 = sbr.rel (0) target = $region21
    $region20: #{tpu_custom_call.1} parent=1 // pred_region
      %s61 = ssub.s32 32, 32
      %62 = vsyncadd [#allocation10], %s61
      %s64 = sshll.u32 [#allocation9], 4
      %s65 = int_to_ptr.vmem [resolvable:$true] %s64
      %67 = dma.hbm_to_vmem [thread:$0]  %s4, 32, %s65, [#allocation10]
    $region21: #{tpu_custom_call.1} parent=1 // pred_fallthru
      _
    // Predicated region
    $region22: #{tpu_custom_call.1} parent=1 // pred_check
      _
    $region23: #{tpu_custom_call.1} parent=1 // pred_check_branch
      %69 = sbr.rel (0) target = $region25
    $region24: #{tpu_custom_call.1} parent=1 // pred_region
      _
    $region25: #{tpu_custom_call.1} parent=1 // pred_fallthru
      _
    // Predicated region
    $region26: #{tpu_custom_call.1} parent=1 // pred_check
      _
    $region27: #{tpu_custom_call.1} parent=1 // pred_check_branch
      %71 = sbr.rel (0) target = $region29
    $region28: #{tpu_custom_call.1} parent=1 // pred_region
      %s73 = ssub.s32 256, 256
      %74 = vsyncadd [#allocation10], %s73
      %s75 = sshll.u32 [#allocation11], 4
      %s76 = int_to_ptr.vmem [resolvable:$true] %s75
      %81 = dma.hbm_to_vmem [thread:$0]  %s6, 256, %s76, [#allocation10], 128, 128, 8
    $region29: #{tpu_custom_call.1} parent=1 // pred_fallthru
      _
    // Predicated region
    $region30: #{tpu_custom_call.1} parent=1 // pred_check
      _
    $region31: #{tpu_custom_call.1} parent=1 // pred_check_branch
      %83 = sbr.rel (0) target = $region33
    $region32: #{tpu_custom_call.1} parent=1 // pred_region
      %84 = dma.done [#allocation4], 128
    $region33: #{tpu_custom_call.1} parent=1 // pred_fallthru
      _
    // Predicated region
    $region34: #{tpu_custom_call.1} parent=1 // pred_check
      _
    $region35: #{tpu_custom_call.1} parent=1 // pred_check_branch
      %86 = sbr.rel (0) target = $region37
    $region36: #{tpu_custom_call.1} parent=1 // pred_region
      %87 = dma.done [#allocation7], 1024
    $region37: #{tpu_custom_call.1} parent=1 // pred_fallthru
      _
    // Predicated region
    $region38: #{tpu_custom_call.1} parent=1 // pred_check
      _
    $region39: #{tpu_custom_call.1} parent=1 // pred_check_branch
      %89 = sbr.rel (0) target = $region41
    $region40: #{tpu_custom_call.1} parent=1 // pred_region
      %90 = dma.done [#allocation7], 2048
    $region41: #{tpu_custom_call.1} parent=1 // pred_fallthru
      _
    // Predicated region
    $region42: #{tpu_custom_call.1} parent=1 // pred_check
      _
    $region43: #{tpu_custom_call.1} parent=1 // pred_check_branch
      %92 = sbr.rel (0) target = $region45
    $region44: #{tpu_custom_call.1} parent=1 // pred_region
      %93 = dma.done [#allocation10], 32
    $region45: #{tpu_custom_call.1} parent=1 // pred_fallthru
      _
    // Predicated region
    $region46: #{tpu_custom_call.1} parent=1 // pred_check
      _
    $region47: #{tpu_custom_call.1} parent=1 // pred_check_branch
      %95 = sbr.rel (0) target = $region49
    $region48: #{tpu_custom_call.1} parent=1 // pred_region
      %96 = dma.done [#allocation10], 256
    $region49: #{tpu_custom_call.1} parent=1 // pred_fallthru
      _
    %p98 = scmp.eq.s32.totalorder 0, 0
    // Predicated region
    $region50: #{tpu_custom_call.1} parent=1 // pred_check
      %p99 = pneg %p98
    $region51: #{tpu_custom_call.1} parent=1 // pred_check_branch
      %101 = sbr.rel (%p99) target = $region53
    $region52: #{tpu_custom_call.1} parent=1 // pred_region
      %102 = vst [vmem:[#allocation2] sm:$0xff] 0.0
      %103 = vst [vmem:[#allocation2 + $0x8] sm:$0xff] 0.0
    $region53: #{tpu_custom_call.1} parent=1 // pred_fallthru
      _
    %v104 = vld [vmem:[#allocation2] sm:$0xff]
    %v105 = vld [vmem:[#allocation2 + $0x8] sm:$0xff]
    %v106 = vld [vmem:[#allocation3] sm:$0xf]
    %v107 = vld [vmem:[#allocation3 + $0x4] sm:$0xf]
    %v108 = vld [vmem:[#allocation6] sm:$0xf]
    %v109 = vld [vmem:[#allocation6 + $0x4] sm:$0xf]
    %v110 = vld [vmem:[#allocation6 + $0x8] sm:$0xf]
    %v111 = vld [vmem:[#allocation6 + $0xc] sm:$0xf]
    %v112 = vld [vmem:[#allocation6 + $0x10] sm:$0xf]
    %v113 = vld [vmem:[#allocation6 + $0x14] sm:$0xf]
    %v114 = vld [vmem:[#allocation6 + $0x18] sm:$0xf]
    %v115 = vld [vmem:[#allocation6 + $0x1c] sm:$0xf]
    %v116 = vld [vmem:[#allocation6 + $0x20] sm:$0xf]
    %v117 = vld [vmem:[#allocation6 + $0x24] sm:$0xf]
    %v118 = vld [vmem:[#allocation6 + $0x28] sm:$0xf]
    %v119 = vld [vmem:[#allocation6 + $0x2c] sm:$0xf]
    %v120 = vld [vmem:[#allocation6 + $0x30] sm:$0xf]
    %v121 = vld [vmem:[#allocation6 + $0x34] sm:$0xf]
    %v122 = vld [vmem:[#allocation6 + $0x38] sm:$0xf]
    %v123 = vld [vmem:[#allocation6 + $0x3c] sm:$0xf]
    %v126 = vunpack.c.l.b16 %v106
    %v127 = vunpack.c.l.b16 %v107
    %v128 = vpack.c.b16 %v127, %v126
    %v146 = vunpack.c.l.b16 %v108
    %v147 = vunpack.c.l.b16 %v109
    %v148 = vunpack.c.l.b16 %v110
    %v149 = vunpack.c.l.b16 %v111
    %v150 = vunpack.c.l.b16 %v112
    %v151 = vunpack.c.l.b16 %v113
    %v152 = vunpack.c.l.b16 %v114
    %v153 = vunpack.c.l.b16 %v115
    %v154 = vunpack.c.l.b16 %v116
    %v155 = vunpack.c.l.b16 %v117
    %v156 = vunpack.c.l.b16 %v118
    %v157 = vunpack.c.l.b16 %v119
    %v158 = vunpack.c.l.b16 %v120
    %v159 = vunpack.c.l.b16 %v121
    %v160 = vunpack.c.l.b16 %v122
    %v161 = vunpack.c.l.b16 %v123
    %v162 = vpack.c.b16 %v147, %v146
    %v163 = vpack.c.b16 %v149, %v148
    %v164 = vpack.c.b16 %v151, %v150
    %v165 = vpack.c.b16 %v153, %v152
    %v166 = vpack.c.b16 %v155, %v154
    %v167 = vpack.c.b16 %v157, %v156
    %v168 = vpack.c.b16 %v159, %v158
    %v169 = vpack.c.b16 %v161, %v160
    %178 = vmatprep.subr.bf16.mxu0 0
    %179 = vmatpush1.bf16.msra.mxu0 %v169
    %180 = vmatprep.subr.bf16.mxu0 0
    %181 = vmatpush1.bf16.msra.mxu0 %v168
    %182 = vmatprep.subr.bf16.mxu0 0
    %183 = vmatpush1.bf16.msra.mxu0 %v167
    %184 = vmatprep.subr.bf16.mxu0 0
    %185 = vmatpush1.bf16.msra.mxu0 %v166
    %186 = vmatprep.subr.bf16.mxu0 0
    %187 = vmatpush1.bf16.msra.mxu0 %v165
    %188 = vmatprep.subr.bf16.mxu0 0
    %189 = vmatpush1.bf16.msra.mxu0 %v164
    %190 = vmatprep.subr.bf16.mxu0 0
    %191 = vmatpush1.bf16.msra.mxu0 %v163
    %192 = vmatprep.subr.bf16.mxu0 0
    %193 = vmatpush1.bf16.msra.mxu0 %v162
    %194 = vmatprep.subr.bf16.mxu0 0
    %195 = vmatpush2.bf16.msra.mxu0 0
    %196 = vmatprep.subr.bf16.mxu0 0
    %197 = vmatpush2.bf16.msra.mxu0 0
    %198 = vmatprep.subr.bf16.mxu0 0
    %199 = vmatpush2.bf16.msra.mxu0 0
    %200 = vmatprep.subr.bf16.mxu0 0
    %201 = vmatpush2.bf16.msra.mxu0 0
    %202 = vmatprep.subr.bf16.mxu0 0
    %203 = vmatpush2.bf16.msra.mxu0 0
    %204 = vmatprep.subr.bf16.mxu0 0
    %205 = vmatpush2.bf16.msra.mxu0 0
    %206 = vmatprep.subr.bf16.mxu0 0
    %207 = vmatpush2.bf16.msra.mxu0 0
    %208 = vmatprep.subr.bf16.mxu0 0
    %209 = vmatpush2.bf16.msra.mxu0 0
    %210 = vmatprep.mubr.bf16.mxu0 0
    %211 = vmatmul.mubr.bf16.gmra.mxu0 %v128
    %v212 = vpop.f32.mrf.mxu0
    %v213 = vadd.f32 0.0, %v212
    %v214 = vpop.f32.mrf.mxu0
    %v215 = vpop.f32.mrf.mxu0
    %v216 = vadd.f32 0.0, %v215
    %v217 = vpop.f32.mrf.mxu0
    %218 = vdwg.mxu0
    %v219 = vadd.f32 %v104, %v213
    %v220 = vadd.f32 %v105, %v216
    %221 = vst [vmem:[#allocation2] sm:$0xff] %v219
    %222 = vst [vmem:[#allocation2 + $0x8] sm:$0xff] %v220
    // Predicated region
    $region54: #{tpu_custom_call.1} parent=1 // pred_check
      %p223 = pneg %p98
    $region55: #{tpu_custom_call.1} parent=1 // pred_check_branch
      %225 = sbr.rel (%p223) target = $region57
    $region56: #{tpu_custom_call.1} parent=1 // pred_region
      %v226 = vld [vmem:[#allocation2] sm:$0xff]
      %v227 = vld [vmem:[#allocation2 + $0x8] sm:$0xff]
      %v228 = vld [vmem:[%s2] sm:$0x1]
      %v230 = vlaneseq
      %v231 = vshrl.u32 %v230, 7
      %v232 = vsub.s32 0, %v231
      %v233 = vrot.slane %v228, %v232
      %v235 = vadd.f32 %v226, %v233
      %v236 = vadd.f32 %v227, %v233
      %v237 = vmax.f32 %v235, 0.0
      %v238 = vmax.f32 %v236, 0.0
      %v239 = vld [vmem:[%s5] sm:$0xf]
      %v240 = vld [vmem:[%s5 + $0x4] sm:$0xf]
      %v241 = vunpack.c.l.bf16 %v239
      %v242 = vunpack.c.l.bf16 %v240
      %v243 = vmul.f32 %v237, %v241
      %v244 = vmul.f32 %v238, %v242
      %v245 = vpack.c.bf16 %v244, %v243
      %v246 = vld [vmem:[#allocation8] sm:$0xff]
      %v247 = vld [vmem:[#allocation8 + $0x8] sm:$0xff]
      %v248 = vld [vmem:[#allocation8 + $0x10] sm:$0xff]
      %v249 = vld [vmem:[#allocation8 + $0x18] sm:$0xff]
      %v250 = vld [vmem:[#allocation8 + $0x20] sm:$0xff]
      %v251 = vld [vmem:[#allocation8 + $0x28] sm:$0xff]
      %v252 = vld [vmem:[#allocation8 + $0x30] sm:$0xff]
      %v253 = vld [vmem:[#allocation8 + $0x38] sm:$0xff]
      %v254 = vld [vmem:[#allocation8 + $0x40] sm:$0xff]
      %v255 = vld [vmem:[#allocation8 + $0x48] sm:$0xff]
      %v256 = vld [vmem:[#allocation8 + $0x50] sm:$0xff]
      %v257 = vld [vmem:[#allocation8 + $0x58] sm:$0xff]
      %v258 = vld [vmem:[#allocation8 + $0x60] sm:$0xff]
      %v259 = vld [vmem:[#allocation8 + $0x68] sm:$0xff]
      %v260 = vld [vmem:[#allocation8 + $0x70] sm:$0xff]
      %v261 = vld [vmem:[#allocation8 + $0x78] sm:$0xff]
      %v262 = vld [vmem:[#allocation9] sm:$0x3]
      %v264 = vlaneseq
      %v265 = vshrl.u32 %v264, 7
      %v266 = vsub.s32 0, %v265
      %v267 = vrot.slane %v262, %v266
      %v268 = vlaneseq
      %v269 = vshrl.u32 %v268, 7
      %v270 = vsub.s32 1, %v269
      %v271 = vrot.slane %v262, %v270
      %v290 = vunpack.c.l.b16 %v246
      %v291 = vunpack.c.h.b16 %v246
      %v292 = vunpack.c.l.b16 %v247
      %v293 = vunpack.c.h.b16 %v247
      %v294 = vunpack.c.l.b16 %v248
      %v295 = vunpack.c.h.b16 %v248
      %v296 = vunpack.c.l.b16 %v249
      %v297 = vunpack.c.h.b16 %v249
      %v298 = vunpack.c.l.b16 %v250
      %v299 = vunpack.c.h.b16 %v250
      %v300 = vunpack.c.l.b16 %v251
      %v301 = vunpack.c.h.b16 %v251
      %v302 = vunpack.c.l.b16 %v252
      %v303 = vunpack.c.h.b16 %v252
      %v304 = vunpack.c.l.b16 %v253
      %v305 = vunpack.c.h.b16 %v253
      %v306 = vunpack.c.l.b16 %v254
      %v307 = vunpack.c.h.b16 %v254
      %v308 = vunpack.c.l.b16 %v255
      %v309 = vunpack.c.h.b16 %v255
      %v310 = vunpack.c.l.b16 %v256
      %v311 = vunpack.c.h.b16 %v256
      %v312 = vunpack.c.l.b16 %v257
      %v313 = vunpack.c.h.b16 %v257
      %v314 = vunpack.c.l.b16 %v258
      %v315 = vunpack.c.h.b16 %v258
      %v316 = vunpack.c.l.b16 %v259
      %v317 = vunpack.c.h.b16 %v259
      %v318 = vunpack.c.l.b16 %v260
      %v319 = vunpack.c.h.b16 %v260
      %v320 = vunpack.c.l.b16 %v261
      %v321 = vunpack.c.h.b16 %v261
      %v322 = vpack.c.b16 %v292, %v290
      %v323 = vpack.c.b16 %v293, %v291
      %v324 = vpack.c.b16 %v296, %v294
      %v325 = vpack.c.b16 %v297, %v295
      %v326 = vpack.c.b16 %v300, %v298
      %v327 = vpack.c.b16 %v301, %v299
      %v328 = vpack.c.b16 %v304, %v302
      %v329 = vpack.c.b16 %v305, %v303
      %v330 = vpack.c.b16 %v308, %v306
      %v331 = vpack.c.b16 %v309, %v307
      %v332 = vpack.c.b16 %v312, %v310
      %v333 = vpack.c.b16 %v313, %v311
      %v334 = vpack.c.b16 %v316, %v314
      %v335 = vpack.c.b16 %v317, %v315
      %v336 = vpack.c.b16 %v320, %v318
      %v337 = vpack.c.b16 %v321, %v319
      %354 = vmatprep.subr.bf16.mxu0 %v337
      %355 = vmatpush1.bf16.msra.mxu0 %v336
      %356 = vmatprep.subr.bf16.mxu0 %v335
      %357 = vmatpush1.bf16.msra.mxu0 %v334
      %358 = vmatprep.subr.bf16.mxu0 %v333
      %359 = vmatpush1.bf16.msra.mxu0 %v332
      %360 = vmatprep.subr.bf16.mxu0 %v331
      %361 = vmatpush1.bf16.msra.mxu0 %v330
      %362 = vmatprep.subr.bf16.mxu0 %v329
      %363 = vmatpush1.bf16.msra.mxu0 %v328
      %364 = vmatprep.subr.bf16.mxu0 %v327
      %365 = vmatpush1.bf16.msra.mxu0 %v326
      %366 = vmatprep.subr.bf16.mxu0 %v325
      %367 = vmatpush1.bf16.msra.mxu0 %v324
      %368 = vmatprep.subr.bf16.mxu0 %v323
      %369 = vmatpush1.bf16.msra.mxu0 %v322
      %370 = vmatprep.subr.bf16.mxu0 0
      %371 = vmatpush2.bf16.msra.mxu0 0
      %372 = vmatprep.subr.bf16.mxu0 0
      %373 = vmatpush2.bf16.msra.mxu0 0
      %374 = vmatprep.subr.bf16.mxu0 0
      %375 = vmatpush2.bf16.msra.mxu0 0
      %376 = vmatprep.subr.bf16.mxu0 0
      %377 = vmatpush2.bf16.msra.mxu0 0
      %378 = vmatprep.subr.bf16.mxu0 0
      %379 = vmatpush2.bf16.msra.mxu0 0
      %380 = vmatprep.subr.bf16.mxu0 0
      %381 = vmatpush2.bf16.msra.mxu0 0
      %382 = vmatprep.subr.bf16.mxu0 0
      %383 = vmatpush2.bf16.msra.mxu0 0
      %384 = vmatprep.subr.bf16.mxu0 0
      %385 = vmatpush2.bf16.msra.mxu0 0
      %386 = vmatprep.mubr.bf16.mxu0 0
      %387 = vmatmul.mubr.bf16.gmra.mxu0 %v245
      %v388 = vpop.f32.mrf.mxu0
      %v389 = vadd.f32 %v267, %v388
      %v390 = vpop.f32.mrf.mxu0
      %v391 = vadd.f32 %v271, %v390
      %v392 = vpop.f32.mrf.mxu0
      %v393 = vadd.f32 %v267, %v392
      %v394 = vpop.f32.mrf.mxu0
      %v395 = vadd.f32 %v271, %v394
      %396 = vdwg.mxu0
      %v397 = vld [vmem:[#allocation11] sm:$0xff]
      %v398 = vld [vmem:[#allocation11 + $0x8] sm:$0xff]
      %v399 = vmul.f32 %v391, 0.5
      %v400 = vmul.f32 %v395, 0.5
      %v401 = vmul.f32 %v399, 1.442695
      %v402 = vpow.pop %v401
      %v403 = vmul.f32 %v400, 1.442695
      %v404 = vpow.pop %v403
      %v405 = vmul.f32 %v397, %v402
      %v406 = vmul.f32 %v398, %v404
      %v407 = vadd.f32 %v405, %v389
      %v408 = vadd.f32 %v406, %v393
      %409 = vst [vmem:[#allocation12] sm:$0xff] %v407
      %410 = vst [vmem:[#allocation12 + $0x8] sm:$0xff] %v408
      %411 = vst [vmem:[#allocation13] sm:$0xff] %v389
      %412 = vst [vmem:[#allocation13 + $0x8] sm:$0xff] %v393
      %413 = vst [vmem:[#allocation15] sm:$0xff] %v391
      %414 = vst [vmem:[#allocation15 + $0x8] sm:$0xff] %v395
    $region57: #{tpu_custom_call.1} parent=1 // pred_fallthru
      _
    // Predicated region
    $region58: #{tpu_custom_call.1} parent=1 // pred_check
      _
    $region59: #{tpu_custom_call.1} parent=1 // pred_check_branch
      %416 = sbr.rel (0) target = $region61
    $region60: #{tpu_custom_call.1} parent=1 // pred_region
      %s418 = ssub.s32 256, 256
      %419 = vsyncadd [#allocation5], %s418
      %s420 = sshll.u32 [#allocation12], 4
      %s421 = int_to_ptr.vmem [resolvable:$true] %s420
      %426 = dma.vmem_to_hbm [thread:$0]  %s421, 256, %s7, [#allocation5], 128, 128, 8
    $region61: #{tpu_custom_call.1} parent=1 // pred_fallthru
      _
    // Predicated region
    $region62: #{tpu_custom_call.1} parent=1 // pred_check
      _
    $region63: #{tpu_custom_call.1} parent=1 // pred_check_branch
      %428 = sbr.rel (0) target = $region65
    $region64: #{tpu_custom_call.1} parent=1 // pred_region
      %s430 = ssub.s32 256, 256
      %431 = vsyncadd [#allocation14], %s430
      %s432 = sshll.u32 [#allocation13], 4
      %s433 = int_to_ptr.vmem [resolvable:$true] %s432
      %438 = dma.vmem_to_hbm [thread:$0]  %s433, 256, %s8, [#allocation14], 128, 128, 8
    $region65: #{tpu_custom_call.1} parent=1 // pred_fallthru
      _
    // Predicated region
    $region66: #{tpu_custom_call.1} parent=1 // pred_check
      _
    $region67: #{tpu_custom_call.1} parent=1 // pred_check_branch
      %440 = sbr.rel (0) target = $region69
    $region68: #{tpu_custom_call.1} parent=1 // pred_region
      %s442 = ssub.s32 256, 256
      %443 = vsyncadd [#allocation14], %s442
      %s444 = sshll.u32 [#allocation15], 4
      %s445 = int_to_ptr.vmem [resolvable:$true] %s444
      %450 = dma.vmem_to_hbm [thread:$0]  %s445, 256, %s9, [#allocation14], 128, 128, 8
    $region69: #{tpu_custom_call.1} parent=1 // pred_fallthru
      _
    // Predicated region
    $region70: #{tpu_custom_call.1} parent=1 // pred_check
      _
    $region71: #{tpu_custom_call.1} parent=1 // pred_check_branch
      %452 = sbr.rel (0) target = $region73
    $region72: #{tpu_custom_call.1} parent=1 // pred_region
      %453 = dma.done [#allocation5], 256
    $region73: #{tpu_custom_call.1} parent=1 // pred_fallthru
      _
    // Predicated region
    $region74: #{tpu_custom_call.1} parent=1 // pred_check
      _
    $region75: #{tpu_custom_call.1} parent=1 // pred_check_branch
      %455 = sbr.rel (0) target = $region77
    $region76: #{tpu_custom_call.1} parent=1 // pred_region
      %456 = dma.done [#allocation14], 256
    $region77: #{tpu_custom_call.1} parent=1 // pred_fallthru
      _
    // Predicated region
    $region78: #{tpu_custom_call.1} parent=1 // pred_check
      _
    $region79: #{tpu_custom_call.1} parent=1 // pred_check_branch
      %458 = sbr.rel (0) target = $region81
    $region80: #{tpu_custom_call.1} parent=1 // pred_region
      %459 = dma.done [#allocation14], 256
    $region81: #{tpu_custom_call.1} parent=1 // pred_fallthru
      _
    %460 = vsyncpa [#allocation4], 1
    %461 = vsyncpa [#allocation7], 1
    %462 = vsyncpa [#allocation10], 1
    %463 = vsyncpa [#allocation5], 1
    %464 = vsyncpa [#allocation14], 1

</llo_original>
